<compile_context>
chip_gen: v5e
topology: v5e:2x2
jax: 0.10.0
libtpu: 0.0.40
codegen_flags: <defaults>
</compile_context>

<pallas_src>
import jax
import jax.numpy as jnp
from jax.experimental import pallas as pl
from jax.experimental.pallas import tpu as pltpu


def _mlp_kernel(x_ref, w1_ref, b1_ref, w2_ref, b2_ref, out_ref):
    # x_ref:  (4, T) VMEM block, batch rides the 128-lane axis.
    # w1_ref: (8, 4), b1_ref: (8, 1), w2_ref: (3, 8), b2_ref: (3, 1) -- VMEM, resident.
    # out_ref:(3, T) VMEM block.
    x = x_ref[...]                                              # (4, T)

    # Layer 1 on the MXU: h = relu(W1 @ x + b1)  -> (8, T), sublane-dense.
    h = jnp.dot(w1_ref[...], x, preferred_element_type=jnp.float32)
    h = jnp.maximum(h + b1_ref[...], 0.0)

    # Layer 2 on the MXU: logits = W2 @ h + b2   -> (3, T).
    logits = jnp.dot(w2_ref[...], h, preferred_element_type=jnp.float32)
    logits = logits + b2_ref[...]

    # log-softmax over the 3 class rows (sublane axis).  Row reductions go to
    # the XLU, exp/log to the EUP; the VPU stays nearly idle.
    m = jnp.max(logits, axis=0, keepdims=True)                  # (1, T)
    s = logits - m
    lse = jnp.log(jnp.sum(jnp.exp(s), axis=0, keepdims=True))   # (1, T)
    out_ref[...] = s - lse                                      # single dense (3, T) store


def multiclass_forward(x, w1, b1, w2, b2, tile_n=131072):
    """x: (N, 4) f32 -> (N, 3) f32 log-probabilities.

    Weights use the PyTorch nn.Linear layout: w1 (8, 4), b1 (8,), w2 (3, 8), b2 (3,).
    """
    n = x.shape[0]

    # --- batch tiling: batch rides the 128-lane axis -------------------------
    tile_cap = max(128, (int(tile_n) // 128) * 128)   # lane tiles must be multiples of 128
    n128 = pl.cdiv(n, 128) * 128                      # minimal lane padding (not up to tile)
    grid = pl.cdiv(n128, tile_cap)
    if n128 >= 2 * 128:
        grid = max(grid, 2)                           # >=2 steps so v7x can use both TCs
    tile = pl.cdiv(n128 // 128, grid) * 128           # even split, multiple of 128
    n_pad = grid * tile                               # over-pad < grid*128 columns

    # Lane-dense, feature-major slab (4, n_pad).  This transpose (+pad) is the
    # only wrapper relayout pass; drop it if the producer already supplies (4, N).
    x_t = x.astype(jnp.float32).T
    if n_pad != n:
        x_t = jnp.pad(x_t, ((0, 0), (0, n_pad - n)))  # deterministic zero pad

    w1 = w1.astype(jnp.float32)                       # (8, 4)
    w2 = w2.astype(jnp.float32)                       # (3, 8)
    b1c = b1.astype(jnp.float32).reshape(8, 1)
    b2c = b2.astype(jnp.float32).reshape(3, 1)

    param_bytes = 4 * (w1.size + b1c.size + w2.size + b2c.size)
    cost = pl.CostEstimate(
        flops=130 * n_pad,                            # two tiny GEMMs + softmax adds
        transcendentals=4 * n_pad,                    # 3x exp + 1x log per column
        bytes_accessed=(4 + 3) * 4 * n_pad + param_bytes,
    )

    out_t = pl.pallas_call(
        _mlp_kernel,
        out_shape=jax.ShapeDtypeStruct((3, n_pad), jnp.float32),
        grid=(grid,),
        in_specs=[
            pl.BlockSpec((4, tile), lambda i: (0, i)),            # x, pipelined
            pl.BlockSpec(memory_space=pltpu.MemorySpace.VMEM),    # w1 (resident)
            pl.BlockSpec(memory_space=pltpu.MemorySpace.VMEM),    # b1
            pl.BlockSpec(memory_space=pltpu.MemorySpace.VMEM),    # w2
            pl.BlockSpec(memory_space=pltpu.MemorySpace.VMEM),    # b2
        ],
        out_specs=pl.BlockSpec((3, tile), lambda i: (0, i)),
        compiler_params=pltpu.CompilerParams(
            dimension_semantics=("parallel",),
            # Above v5e's 16 MiB scoped default, below v7x's 64 MiB/TC physical.
            vmem_limit_bytes=56 * 1024 * 1024,
        ),
        cost_estimate=cost,
    )(x_t, w1, b1c, w2, b2c)

    # Unpad and return in the PyTorch (N, classes) orientation.
    return out_t[:, :n].T


def init_params(key):
    """Deterministic init mimicking PyTorch nn.Linear (U[-1/sqrt(fan_in), +])."""
    k1, k2, k3, k4 = jax.random.split(key, 4)
    bound1 = 1.0 / jnp.sqrt(4.0)
    bound2 = 1.0 / jnp.sqrt(8.0)
    # torch layout: (out_features, in_features)
    w1 = jax.random.uniform(k1, (8, 4), jnp.float32, -bound1, bound1)
    b1 = jax.random.uniform(k2, (8,), jnp.float32, -bound1, bound1)
    w2 = jax.random.uniform(k3, (3, 8), jnp.float32, -bound2, bound2)
    b2 = jax.random.uniform(k4, (3,), jnp.float32, -bound2, bound2)
    return w1, b1, w2, b2


if __name__ == "__main__":
    key = jax.random.PRNGKey(0)
    kx, kp = jax.random.split(key)

    batch = 8
    x = jax.random.normal(kx, (batch, 4), jnp.float32)
    w1, b1, w2, b2 = init_params(kp)

    out = multiclass_forward(x, w1, b1, w2, b2)
    out = jax.block_until_ready(out)

    # sanity: pure-JAX reference of the PyTorch forward
    h_ref = jnp.maximum(x @ w1.T + b1[None, :], 0.0)
    logits_ref = h_ref @ w2.T + b2[None, :]
    ref = jax.nn.log_softmax(logits_ref, axis=1)
    assert out.shape == (batch, 3)
    assert jnp.allclose(out, ref, atol=1e-4, rtol=1e-4)

    print("KERNEL_OK")
</pallas_src>

<mosaic_0001>
module attributes {stable_mosaic.version = 11 : i64} {
  func.func @_mlp_kernel(%arg0: i32, %arg1: memref<4x128xf32, #tpu.memory_space<vmem>>, %arg2: memref<8x4xf32, #tpu.memory_space<vmem>>, %arg3: memref<8x1xf32, #tpu.memory_space<vmem>>, %arg4: memref<3x8xf32, #tpu.memory_space<vmem>>, %arg5: memref<3x1xf32, #tpu.memory_space<vmem>>, %arg6: memref<3x128xf32, #tpu.memory_space<vmem>>) attributes {dimension_semantics = [#tpu.dimension_semantics<parallel>], iteration_bounds = array<i64: 1>, scalar_prefetch = 0 : i64, scratch_operands = 0 : i64, tpu.core_type = #tpu.core_type<tc>, window_params = [{transform_indices = @transform_0, window_bounds = array<i64: 4, 128>}, {pipeline_mode = #tpu.pipeline_mode<synchronous>, transform_indices = @transform_1, window_bounds = array<i64: 8, 4>}, {pipeline_mode = #tpu.pipeline_mode<synchronous>, transform_indices = @transform_2, window_bounds = array<i64: 8, 1>}, {pipeline_mode = #tpu.pipeline_mode<synchronous>, transform_indices = @transform_3, window_bounds = array<i64: 3, 8>}, {pipeline_mode = #tpu.pipeline_mode<synchronous>, transform_indices = @transform_4, window_bounds = array<i64: 3, 1>}, {transform_indices = @transform_5, window_bounds = array<i64: 3, 128>}]} {
    %c0 = arith.constant 0 : index
    %c0_0 = arith.constant 0 : index
    %0 = vector.load %arg1[%c0, %c0_0] : memref<4x128xf32, #tpu.memory_space<vmem>>, vector<4x128xf32>
    %c0_1 = arith.constant 0 : index
    %c0_2 = arith.constant 0 : index
    %1 = vector.load %arg2[%c0_1, %c0_2] : memref<8x4xf32, #tpu.memory_space<vmem>>, vector<8x4xf32>
    %cst = arith.constant dense<0.000000e+00> : vector<8x128xf32>
    %2 = tpu.matmul %1, %0, %cst {dimension_numbers = #tpu.dot_dimension_numbers<[1], [0], [0], [1], [0, 0, 1, 1], [], []>} : vector<8x4xf32>, vector<4x128xf32>, vector<8x128xf32> -> vector<8x128xf32>
    %c0_3 = arith.constant 0 : index
    %c0_4 = arith.constant 0 : index
    %3 = vector.load %arg3[%c0_3, %c0_4] : memref<8x1xf32, #tpu.memory_space<vmem>>, vector<8x1xf32>
    %4 = vector.broadcast %3 : vector<8x1xf32> to vector<8x128xf32>
    %5 = arith.addf %2, %4 : vector<8x128xf32>
    %cst_5 = arith.constant 0.000000e+00 : f32
    %6 = vector.broadcast %cst_5 : f32 to vector<8x128xf32>
    %7 = arith.maximumf %5, %6 : vector<8x128xf32>
    %c0_6 = arith.constant 0 : index
    %c0_7 = arith.constant 0 : index
    %8 = vector.load %arg4[%c0_6, %c0_7] : memref<3x8xf32, #tpu.memory_space<vmem>>, vector<3x8xf32>
    %cst_8 = arith.constant dense<0.000000e+00> : vector<3x128xf32>
    %9 = tpu.matmul %8, %7, %cst_8 {dimension_numbers = #tpu.dot_dimension_numbers<[1], [0], [0], [1], [0, 0, 1, 1], [], []>} : vector<3x8xf32>, vector<8x128xf32>, vector<3x128xf32> -> vector<3x128xf32>
    %c0_9 = arith.constant 0 : index
    %c0_10 = arith.constant 0 : index
    %10 = vector.load %arg5[%c0_9, %c0_10] : memref<3x1xf32, #tpu.memory_space<vmem>>, vector<3x1xf32>
    %11 = vector.broadcast %10 : vector<3x1xf32> to vector<3x128xf32>
    %12 = arith.addf %9, %11 : vector<3x128xf32>
    %cst_11 = arith.constant dense<0xFF800000> : vector<128xf32>
    %13 = vector.multi_reduction <maximumf>, %12, %cst_11 [0] : vector<3x128xf32> to vector<128xf32>
    %14 = vector.shape_cast %13 : vector<128xf32> to vector<1x128xf32>
    %15 = vector.broadcast %14 : vector<1x128xf32> to vector<3x128xf32>
    %16 = arith.subf %12, %15 : vector<3x128xf32>
    %17 = math.exp %16 : vector<3x128xf32>
    %cst_12 = arith.constant dense<0.000000e+00> : vector<128xf32>
    %18 = vector.multi_reduction <add>, %17, %cst_12 [0] : vector<3x128xf32> to vector<128xf32>
    %19 = vector.shape_cast %18 : vector<128xf32> to vector<1x128xf32>
    %20 = math.log %19 : vector<1x128xf32>
    %21 = vector.broadcast %20 : vector<1x128xf32> to vector<3x128xf32>
    %22 = arith.subf %16, %21 : vector<3x128xf32>
    %c0_13 = arith.constant 0 : index
    %c0_14 = arith.constant 0 : index
    %23 = vector.load %arg6[%c0_13, %c0_14] : memref<3x128xf32, #tpu.memory_space<vmem>>, vector<3x128xf32>
    tpu.vector_store %arg6[%c0_13, %c0_14], %22 {strides = array<i32>} : memref<3x128xf32, #tpu.memory_space<vmem>>, vector<3x128xf32>,
    return
  }
  func.func @transform_0(%arg0: i32) -> (i32, i32) {
    %c0_i32 = arith.constant 0 : i32
    %c0_i32_0 = arith.constant 0 : i32
    return %c0_i32, %arg0 : i32, i32
  }
  func.func @transform_1(%arg0: i32) -> (i32, i32) {
    %c0_i32 = arith.constant 0 : i32
    %c0_i32_0 = arith.constant 0 : i32
    %c0_i32_1 = arith.constant 0 : i32
    return %c0_i32, %c0_i32_0 : i32, i32
  }
  func.func @transform_2(%arg0: i32) -> (i32, i32) {
    %c0_i32 = arith.constant 0 : i32
    %c0_i32_0 = arith.constant 0 : i32
    %c0_i32_1 = arith.constant 0 : i32
    return %c0_i32, %c0_i32_0 : i32, i32
  }
  func.func @transform_3(%arg0: i32) -> (i32, i32) {
    %c0_i32 = arith.constant 0 : i32
    %c0_i32_0 = arith.constant 0 : i32
    %c0_i32_1 = arith.constant 0 : i32
    return %c0_i32, %c0_i32_0 : i32, i32
  }
  func.func @transform_4(%arg0: i32) -> (i32, i32) {
    %c0_i32 = arith.constant 0 : i32
    %c0_i32_0 = arith.constant 0 : i32
    %c0_i32_1 = arith.constant 0 : i32
    return %c0_i32, %c0_i32_0 : i32, i32
  }
  func.func @transform_5(%arg0: i32) -> (i32, i32) {
    %c0_i32 = arith.constant 0 : i32
    %c0_i32_0 = arith.constant 0 : i32
    return %c0_i32, %arg0 : i32, i32
  }
}

</mosaic_0001>

<llo_original>
// kernel: tpu_custom_call.1
$region0: #{tpu_custom_call.1}
  #allocation0 [shape = 'u32[]', space=smem, size = 0x4, offset = 0x4, fixed_abs, tag = 'smem constant byte address 0x4 - core index']
  #allocation1 [shape = 'u32[72,128]{1,0:T(1,128)}', space=vmem, size = 0x9000, scoped, tag = 'internal scratch']
  %s0 = inlined_call_operand.vmem [shape: f32[4,128], index: 0, kind: input, shape index: {}]
  %s1 = inlined_call_operand.vmem [shape: f32[8,4], index: 1, kind: input, shape index: {}]
  %s2 = inlined_call_operand.vmem [shape: f32[8,1], index: 2, kind: input, shape index: {}]
  %s3 = inlined_call_operand.vmem [shape: f32[3,8], index: 3, kind: input, shape index: {}]
  %s4 = inlined_call_operand.vmem [shape: f32[3,1], index: 4, kind: input, shape index: {}]
  %s5 = inlined_call_operand.hbm [shape: f32[3,128], index: 5, kind: output, shape index: {}]
  %s6 = sld [smem:[#allocation0]]
  $region30: #{tpu_custom_call.1} parent=0
    _
  %s8 = ssub.s32 1, %s6
  %s9 = scalar_select 0, %s8, %s6
  $region1: #{tpu_custom_call.1} parent=0
    #allocation2 [shape = 'u8[2048]{0}', space=vmem, size = 0x800, scoped, tag = 'output window, operand 0, single buffered']
    #allocation3 [shape = 's32[1]{0}', space=sflag, size = 0x4, scoped, tag = 'scoped memory for tpu_custom_call.1']
    %10 = vsyncpa [#allocation3], 0
    // Predicated region
    $region2: #{tpu_custom_call.1} parent=1 // pred_check
      _
    $region3: #{tpu_custom_call.1} parent=1 // pred_check_branch
      %12 = sbr.rel (0) target = $region5
    $region4: #{tpu_custom_call.1} parent=1 // pred_region
      _
    $region5: #{tpu_custom_call.1} parent=1 // pred_fallthru
      _
    // Predicated region
    $region6: #{tpu_custom_call.1} parent=1 // pred_check
      _
    $region7: #{tpu_custom_call.1} parent=1 // pred_check_branch
      %14 = sbr.rel (0) target = $region9
    $region8: #{tpu_custom_call.1} parent=1 // pred_region
      _
    $region9: #{tpu_custom_call.1} parent=1 // pred_fallthru
      _
    // Predicated region
    $region10: #{tpu_custom_call.1} parent=1 // pred_check
      _
    $region11: #{tpu_custom_call.1} parent=1 // pred_check_branch
      %16 = sbr.rel (0) target = $region13
    $region12: #{tpu_custom_call.1} parent=1 // pred_region
      _
    $region13: #{tpu_custom_call.1} parent=1 // pred_fallthru
      _
    // Predicated region
    $region14: #{tpu_custom_call.1} parent=1 // pred_check
      _
    $region15: #{tpu_custom_call.1} parent=1 // pred_check_branch
      %18 = sbr.rel (0) target = $region17
    $region16: #{tpu_custom_call.1} parent=1 // pred_region
      _
    $region17: #{tpu_custom_call.1} parent=1 // pred_fallthru
      _
    // Predicated region
    $region18: #{tpu_custom_call.1} parent=1 // pred_check
      _
    $region19: #{tpu_custom_call.1} parent=1 // pred_check_branch
      %20 = sbr.rel (0) target = $region21
    $region20: #{tpu_custom_call.1} parent=1 // pred_region
      _
    $region21: #{tpu_custom_call.1} parent=1 // pred_fallthru
      _
    %v21 = vld [vmem:[%s0] sm:$0xf]
    %v22 = vld [vmem:[%s1] sm:$0xff]
    %v23 = vld [vmem:[%s2] sm:$0xff]
    %25 = vset.pattern.permute.xlu0 0
    %26 = vperm.xlu0 %25, %v23
    %v27 = vpop.permute.xlu0 %26
    %vm29 = vcmask 31744
    %v31 = vsel %vm29, %v22, 0
    %vm33 = vcmask 1043456
    %v35 = vsel %vm33, %v21, 0
    %37 = vmatpush.msra.mxu0 0.0
    %38 = vmatpush.msra.mxu0 0.0
    %39 = vmatpush.msra.mxu0 0.0
    %40 = vmatpush.msra.mxu0 0.0
    %41 = vmatpush.msra.mxu0 0.0
    %42 = vmatpush.msra.mxu0 0.0
    %43 = vmatpush.msra.mxu0 0.0
    %44 = vmatpush.msra.mxu0 0.0
    %45 = vmatpush.msra.mxu0 0.0
    %46 = vmatpush.msra.mxu0 0.0
    %47 = vmatpush.msra.mxu0 0.0
    %48 = vmatpush.msra.mxu0 0.0
    %49 = vmatpush.msra.mxu0 0.0
    %50 = vmatpush.msra.mxu0 0.0
    %51 = vmatpush.msra.mxu0 0.0
    %52 = vmatpush.msra.mxu0 %v35
    %53 = vmatmul.f32.gmra.mxu0 %v31
    %v54 = vpop.f32.mrf.mxu0
    %v55 = vadd.f32 %v27, %v54
    %56 = vdwg.mxu0
    %v57 = vmax.f32 %v55, 0.0
    %v58 = vld [vmem:[%s3] sm:$0x7]
    %v59 = vld [vmem:[%s4] sm:$0x7]
    %61 = vset.pattern.permute.xlu0 0
    %62 = vperm.xlu0 %61, %v59
    %v63 = vpop.permute.xlu0 %62
    %vm65 = vcmask 64512
    %v67 = vsel %vm65, %v58, 0
    %69 = vmatpush.msra.mxu0 0.0
    %70 = vmatpush.msra.mxu0 0.0
    %71 = vmatpush.msra.mxu0 0.0
    %72 = vmatpush.msra.mxu0 0.0
    %73 = vmatpush.msra.mxu0 0.0
    %74 = vmatpush.msra.mxu0 0.0
    %75 = vmatpush.msra.mxu0 0.0
    %76 = vmatpush.msra.mxu0 0.0
    %77 = vmatpush.msra.mxu0 0.0
    %78 = vmatpush.msra.mxu0 0.0
    %79 = vmatpush.msra.mxu0 0.0
    %80 = vmatpush.msra.mxu0 0.0
    %81 = vmatpush.msra.mxu0 0.0
    %82 = vmatpush.msra.mxu0 0.0
    %83 = vmatpush.msra.mxu0 0.0
    %84 = vmatpush.msra.mxu0 %v57
    %85 = vmatmul.f32.gmra.mxu0 %v67
    %v86 = vpop.f32.mrf.mxu0
    %v87 = vadd.f32 %v63, %v86
    %88 = vdwg.mxu0
    %vm89 = vcmask 1042432
    %v90 = vsel %vm89, %v87, -inf
    %v91 = vrot.slane %v90, 4
    %v92 = vmax.f32 %v90, %v91
    %v93 = vrot.slane %v92, 2
    %v94 = vmax.f32 %v92, %v93
    %v95 = vrot.slane %v94, 1
    %v96 = vmax.f32 %v94, %v95
    %v97 = vsub.f32 %v87, %v96
    %v98 = vmul.f32 %v97, 1.442695
    %v99 = vpow.pop %v98
    %v100 = vsel %vm89, %v99, 0.0
    %v101 = vrot.slane %v100, 4
    %v102 = vadd.f32 %v100, %v101
    %v103 = vrot.slane %v102, 2
    %v104 = vadd.f32 %v102, %v103
    %v105 = vrot.slane %v104, 1
    %v106 = vadd.f32 %v104, %v105
    %v107 = vlog2.pop %v106
    %v108 = vmul.f32 %v107, 0.6931472
    %v109 = vsub.f32 %v97, %v108
    %110 = vst [vmem:[#allocation2] sm:$0x7] %v109
    // Predicated region
    $region22: #{tpu_custom_call.1} parent=1 // pred_check
      _
    $region23: #{tpu_custom_call.1} parent=1 // pred_check_branch
      %112 = sbr.rel (0) target = $region25
    $region24: #{tpu_custom_call.1} parent=1 // pred_region
      %114 = vsyncadd [#allocation3], 0
      %s116 = sshll.u32 [#allocation2], 4
      %s117 = int_to_ptr.vmem [resolvable:$true] %s116
      %s118 = sshll.u32 %s5, 4
      %s119 = int_to_ptr.hbm [resolvable:$true] %s118
      %121 = dma.vmem_to_hbm [thread:$0]  %s117, 64, %s119, [#allocation3]
    $region25: #{tpu_custom_call.1} parent=1 // pred_fallthru
      _
    // Predicated region
    $region26: #{tpu_custom_call.1} parent=1 // pred_check
      _
    $region27: #{tpu_custom_call.1} parent=1 // pred_check_branch
      %123 = sbr.rel (0) target = $region29
    $region28: #{tpu_custom_call.1} parent=1 // pred_region
      %125 = dma.done [#allocation3], 64
    $region29: #{tpu_custom_call.1} parent=1 // pred_fallthru
      _
    %126 = vsyncpa [#allocation3], 1

</llo_original>
